<compile_context>
chip_gen: v6e
topology: v6e:2x2x1
jax: 0.10.0
libtpu: 0.0.40
codegen_flags: <defaults>
</compile_context>

<pallas_src>
import functools

import jax
import jax.numpy as jnp
import numpy as np
from jax import lax
from jax.experimental import pallas as pl
from jax.experimental.pallas import tpu as pltpu

_LANES = 128
_SUBLANES = 8
# 4096 rows x 128 lanes f32 = 2 MiB/block/input; 2 inputs x 2 pipeline buffers
# = 8 MiB, safe under the scoped-VMEM defaults (16 MiB v5e, 32 MiB v6e/v7x).
_MAX_BLOCK_ROWS = 4096
# Leading "parallel" grid axis: split across the 2 TensorCores on v7x,
# plain (cheap) serial loop on single-TC v5e/v6e.
_NUM_CORE_SPLITS = 2


def _stable_focal_terms(x, g):
    """Stable focal-loss per-element terms.  x: f32 logits, g: f32 targets.

    With z = exp(-|x|):
        log(sigmoid(x))     = min(x, 0) - log(1 + z)
        log(1 - sigmoid(x)) = -max(x, 0) - log(1 + z)
        sigmoid(x)          = exp(log(sigmoid(x)))
    3 transcendentals/element, no log(0) / catastrophic cancellation.
    """
    z = jnp.exp(-jnp.abs(x))
    l1z = jnp.log(1.0 + z)
    log_p = jnp.minimum(x, 0.0) - l1z          # log(sigmoid(x))
    log_1mp = -jnp.maximum(x, 0.0) - l1z       # log(1 - sigmoid(x))
    p = jnp.exp(log_p)                         # sigmoid(x)
    pos = g == 1.0                             # gt.eq(1)
    neg = g < 1.0                              # gt.lt(1)
    pos_term = log_p * jnp.square(1.0 - p)                                # log(p)*(1-p)^2
    neg_term = log_1mp * jnp.square(p) * jnp.square(jnp.square(1.0 - g))  # log(1-p)*p^2*(1-g)^4
    return pos, neg, pos_term, neg_term


def _focal_kernel(pred_ref, gt_ref, out_ref, *, n_valid, block_rows,
                  num_blocks, blocks_per_core, need_mask, has_fake):
    # out_ref: resident f32[1, 2, 8, 128] per-core accumulator block
    #   [0, 0]: per-(sublane,lane) sum of pos_loss + neg_loss
    #   [0, 1]: per-(sublane,lane) positive-element count
    c = pl.program_id(0)                    # core split ("parallel")
    i = pl.program_id(1)                    # block within split ("arbitrary")
    gblk = c * blocks_per_core + i          # global block index

    @pl.when(i == 0)
    def _():
        out_ref[...] = jnp.zeros_like(out_ref)

    x = pred_ref[...].astype(jnp.float32)   # pre-sigmoid logits
    g = gt_ref[...].astype(jnp.float32)
    pos, neg, pos_term, neg_term = _stable_focal_terms(x, g)

    def accumulate(pos_m, neg_m):
        # pos/neg are disjoint -> one nested select carries both terms; the
        # num_pos contribution reuses the same pos select.  jnp.where is a
        # select, so inf/NaN garbage in padded regions never propagates.
        contrib = jnp.where(pos_m, pos_term, jnp.where(neg_m, neg_term, 0.0))
        cnt = jnp.where(pos_m, 1.0, 0.0)
        # (block_rows, 128) -> (block_rows//8, 8, 128) keeps (8,128) vreg
        # tiles intact, so the axis-0 sum is a pure VPU add tree (no XLU)
        # feeding a single resident (8,128) tile per quantity.
        out_ref[0, 0, :, :] += contrib.reshape(-1, _SUBLANES, _LANES).sum(axis=0)
        out_ref[0, 1, :, :] += cnt.reshape(-1, _SUBLANES, _LANES).sum(axis=0)

    if need_mask:
        # Only the LAST real block has Pallas row-padding; all other blocks
        # take the cheap unmasked path (pl.when cold paths are skipped).
        @pl.when(gblk < num_blocks - 1)
        def _():
            accumulate(pos, neg)

        @pl.when(gblk == num_blocks - 1)
        def _():
            row = lax.broadcasted_iota(jnp.int32, x.shape, 0)
            col = lax.broadcasted_iota(jnp.int32, x.shape, 1)
            idx = gblk * (block_rows * _LANES) + row * _LANES + col
            valid = idx < n_valid
            accumulate(jnp.logical_and(pos, valid),
                       jnp.logical_and(neg, valid))
    elif has_fake:
        # Odd block count: the one trailing fake step on the second core
        # split re-reads a clamped block; skip its contribution.
        @pl.when(gblk < num_blocks)
        def _():
            accumulate(pos, neg)
    else:
        accumulate(pos, neg)


def _partial_sums(x, g):
    """Plain-JAX (loss_sum, num_pos) for tiny ragged tails (<=127 elements)."""
    pos, neg, pos_term, neg_term = _stable_focal_terms(
        x.astype(jnp.float32), g.astype(jnp.float32))
    contrib = jnp.where(pos, pos_term, jnp.where(neg, neg_term, 0.0))
    return jnp.sum(contrib), jnp.sum(pos.astype(jnp.float32))


def local_focal(pred, gt, *, max_block_rows=_MAX_BLOCK_ROWS):
    """pred: pre-sigmoid logits, gt: target heatmap.  Same shape (e.g. NCHW)."""
    assert pred.shape == gt.shape
    n = int(np.prod(pred.shape))

    flat_pred = pred.reshape(-1)     # contiguous reshape: free (bitcast view)
    flat_gt = gt.reshape(-1)

    rows_main = n // _LANES
    lane_rem = n - rows_main * _LANES        # 0..127 trailing elements
    n_main = rows_main * _LANES

    # Fold the <=127 ragged trailing elements in with plain-JAX math instead
    # of padding/copying the whole heatmap just to append a partial lane row.
    if lane_rem:
        tail_loss, tail_pos = _partial_sums(flat_pred[n_main:],
                                            flat_gt[n_main:])
    else:
        tail_loss = jnp.float32(0.0)
        tail_pos = jnp.float32(0.0)

    if rows_main == 0:
        loss_sum, num_pos = tail_loss, tail_pos
    else:
        if lane_rem:
            pred2d = flat_pred[:n_main].reshape(rows_main, _LANES)
            gt2d = flat_gt[:n_main].reshape(rows_main, _LANES)
        else:
            pred2d = flat_pred.reshape(rows_main, _LANES)
            gt2d = flat_gt.reshape(rows_main, _LANES)

        # block_rows: multiple of 8 (legal block dim + clean (…,8,128) reshape).
        block_rows = min(max_block_rows,
                         -(-rows_main // _SUBLANES) * _SUBLANES)
        num_blocks = -(-rows_main // block_rows)
        blocks_per_core = -(-num_blocks // _NUM_CORE_SPLITS)
        need_mask = (num_blocks * block_rows) != rows_main
        has_fake = (_NUM_CORE_SPLITS * blocks_per_core) != num_blocks

        kernel = functools.partial(
            _focal_kernel, n_valid=n_main, block_rows=block_rows,
            num_blocks=num_blocks, blocks_per_core=blocks_per_core,
            need_mask=need_mask, has_fake=has_fake)

        def in_map(c, i):
            # Clamp so the (at most one) fake trailing step on an odd block
            # count never issues an out-of-bounds block DMA.
            return (jnp.minimum(c * blocks_per_core + i, num_blocks - 1), 0)

        partials = pl.pallas_call(
            kernel,
            out_shape=jax.ShapeDtypeStruct(
                (_NUM_CORE_SPLITS, 2, _SUBLANES, _LANES), jnp.float32),
            grid_spec=pltpu.PrefetchScalarGridSpec(
                num_scalar_prefetch=0,
                grid=(_NUM_CORE_SPLITS, blocks_per_core),
                in_specs=[
                    pl.BlockSpec((block_rows, _LANES), in_map),
                    pl.BlockSpec((block_rows, _LANES), in_map),
                ],
                out_specs=pl.BlockSpec((1, 2, _SUBLANES, _LANES),
                                       lambda c, i: (c, 0, 0, 0)),
            ),
            compiler_params=pltpu.CompilerParams(
                dimension_semantics=("parallel", "arbitrary")),
        )(pred2d, gt2d)

        loss_sum = jnp.sum(partials[:, 0]) + tail_loss
        num_pos = jnp.sum(partials[:, 1]) + tail_pos

    # if num_pos == 0: loss = -neg_loss  else: -(pos_loss + neg_loss)/num_pos
    # (pos contribution is exactly 0 when num_pos == 0, so -loss_sum matches.)
    return jnp.where(num_pos == 0.0, -loss_sum,
                     -loss_sum / jnp.maximum(num_pos, 1.0))


def _ref_local_focal(pred, gt):
    """Plain-JAX mirror of the PyTorch module (sigmoid + direct logs)."""
    p = jax.nn.sigmoid(pred.astype(jnp.float32))
    g = gt.astype(jnp.float32)
    pos = g == 1.0
    neg = g < 1.0
    pos_loss = jnp.sum(jnp.where(pos, jnp.log(p) * (1.0 - p) ** 2, 0.0))
    neg_loss = jnp.sum(
        jnp.where(neg, jnp.log(1.0 - p) * p ** 2 * (1.0 - g) ** 4, 0.0))
    num_pos = jnp.sum(pos.astype(jnp.float32))
    return jnp.where(num_pos == 0.0, -neg_loss,
                     -(pos_loss + neg_loss) / jnp.maximum(num_pos, 1.0))


if __name__ == "__main__":
    key = jax.random.PRNGKey(0)
    k1, k2, k3 = jax.random.split(key, 3)

    # Test 1: standard NCHW heatmap (evenly tiled fast path, dual-core split
    # with one fake trailing step).
    B, C, H, W = 2, 4, 16, 16
    pred = jax.random.normal(k1, (B, C, H, W), dtype=jnp.float32)  # raw logits
    peak_mask = jax.random.uniform(k2, (B, C, H, W)) < 0.05
    soft = jax.random.uniform(k3, (B, C, H, W)) * 0.99
    gt = jnp.where(peak_mask, 1.0, soft).astype(jnp.float32)

    loss = jax.block_until_ready(local_focal(pred, gt))
    ref = jax.block_until_ready(_ref_local_focal(pred, gt))
    if not np.allclose(np.asarray(loss), np.asarray(ref), rtol=1e-4, atol=1e-4):
        raise AssertionError(f"mismatch: kernel={loss} ref={ref}")

    # Test 2: ragged shape -> lane remainder handled in JAX, multiple blocks,
    # partial last block (masked path exercised via small max_block_rows).
    k4, k5, k6 = jax.random.split(jax.random.PRNGKey(1), 3)
    shape2 = (3, 5, 7, 11)  # 1155 elements -> 9 full lane rows + 3 tail elems
    pred2 = jax.random.normal(k4, shape2, dtype=jnp.float32)
    peak2 = jax.random.uniform(k5, shape2) < 0.05
    gt2 = jnp.where(peak2, 1.0,
                    jax.random.uniform(k6, shape2) * 0.99).astype(jnp.float32)

    loss2 = jax.block_until_ready(local_focal(pred2, gt2, max_block_rows=8))
    ref2 = jax.block_until_ready(_ref_local_focal(pred2, gt2))
    if not np.allclose(np.asarray(loss2), np.asarray(ref2),
                       rtol=1e-4, atol=1e-4):
        raise AssertionError(f"mismatch(ragged): kernel={loss2} ref={ref2}")

    # Test 3: no positives -> exercises the `num_pos == 0` branch.
    gt3 = (gt2 * 0.5).astype(jnp.float32)
    loss3 = jax.block_until_ready(local_focal(pred2, gt3, max_block_rows=8))
    ref3 = jax.block_until_ready(_ref_local_focal(pred2, gt3))
    if not np.allclose(np.asarray(loss3), np.asarray(ref3),
                       rtol=1e-4, atol=1e-4):
        raise AssertionError(f"mismatch(no-pos): kernel={loss3} ref={ref3}")

    print("KERNEL_OK")
</pallas_src>

<mosaic_0001>
module attributes {stable_mosaic.version = 11 : i64} {
  func.func @_focal_kernel(%arg0: i32, %arg1: i32, %arg2: memref<16x128xf32, #tpu.memory_space<vmem>>, %arg3: memref<16x128xf32, #tpu.memory_space<vmem>>, %arg4: memref<1x2x8x128xf32, #tpu.memory_space<vmem>>) attributes {dimension_semantics = [#tpu.dimension_semantics<parallel>, #tpu.dimension_semantics<arbitrary>], iteration_bounds = array<i64: 2, 1>, scalar_prefetch = 0 : i64, scratch_operands = 0 : i64, tpu.core_type = #tpu.core_type<tc>, window_params = [{transform_indices = @transform_0, window_bounds = array<i64: 16, 128>}, {transform_indices = @transform_1, window_bounds = array<i64: 16, 128>}, {transform_indices = @transform_2, window_bounds = array<i64: 1, 2, 8, 128>}]} {
    %c1_i32 = arith.constant 1 : i32
    %0 = arith.muli %arg0, %c1_i32 : i32
    %1 = arith.addi %0, %arg1 : i32
    %c0_i32 = arith.constant 0 : i32
    %2 = arith.cmpi eq, %arg1, %c0_i32 : i32
    %3 = arith.extui %2 : i1 to i32
    %c0_i32_0 = arith.constant 0 : i32
    %4 = arith.cmpi ne, %3, %c0_i32_0 : i32
    scf.if %4 {
      %cst_14 = arith.constant 0.000000e+00 : f32
      %41 = vector.broadcast %cst_14 : f32 to vector<1x2x8x128xf32>
      %c0_15 = arith.constant 0 : index
      %c0_16 = arith.constant 0 : index
      %c0_17 = arith.constant 0 : index
      %c0_18 = arith.constant 0 : index
      %42 = vector.load %arg4[%c0_15, %c0_16, %c0_17, %c0_18] : memref<1x2x8x128xf32, #tpu.memory_space<vmem>>, vector<1x2x8x128xf32>
      tpu.vector_store %arg4[%c0_15, %c0_16, %c0_17, %c0_18], %41 {strides = array<i32>} : memref<1x2x8x128xf32, #tpu.memory_space<vmem>>, vector<1x2x8x128xf32>,
    } else {
    }
    %c0 = arith.constant 0 : index
    %c0_1 = arith.constant 0 : index
    %5 = vector.load %arg2[%c0, %c0_1] : memref<16x128xf32, #tpu.memory_space<vmem>>, vector<16x128xf32>
    %c0_2 = arith.constant 0 : index
    %c0_3 = arith.constant 0 : index
    %6 = vector.load %arg3[%c0_2, %c0_3] : memref<16x128xf32, #tpu.memory_space<vmem>>, vector<16x128xf32>
    %7 = math.absf %5 : vector<16x128xf32>
    %cst = arith.constant 0.000000e+00 : f32
    %8 = vector.broadcast %cst : f32 to vector<16x128xf32>
    %9 = arith.subf %8, %7 : vector<16x128xf32>
    %10 = math.exp %9 : vector<16x128xf32>
    %cst_4 = arith.constant 1.000000e+00 : f32
    %11 = vector.broadcast %cst_4 : f32 to vector<16x128xf32>
    %12 = arith.addf %11, %10 : vector<16x128xf32>
    %13 = math.log %12 : vector<16x128xf32>
    %cst_5 = arith.constant 0.000000e+00 : f32
    %14 = vector.broadcast %cst_5 : f32 to vector<16x128xf32>
    %15 = arith.minimumf %5, %14 : vector<16x128xf32>
    %16 = arith.subf %15, %13 : vector<16x128xf32>
    %cst_6 = arith.constant 0.000000e+00 : f32
    %17 = vector.broadcast %cst_6 : f32 to vector<16x128xf32>
    %18 = arith.maximumf %5, %17 : vector<16x128xf32>
    %cst_7 = arith.constant 0.000000e+00 : f32
    %19 = vector.broadcast %cst_7 : f32 to vector<16x128xf32>
    %20 = arith.subf %19, %18 : vector<16x128xf32>
    %21 = arith.subf %20, %13 : vector<16x128xf32>
    %22 = math.exp %16 : vector<16x128xf32>
    %cst_8 = arith.constant 1.000000e+00 : f32
    %23 = vector.broadcast %cst_8 : f32 to vector<16x128xf32>
    %24 = arith.cmpf oeq, %6, %23 : vector<16x128xf32>
    %cst_9 = arith.constant 1.000000e+00 : f32
    %25 = vector.broadcast %cst_9 : f32 to vector<16x128xf32>
    %26 = arith.cmpf olt, %6, %25 : vector<16x128xf32>
    %cst_10 = arith.constant 1.000000e+00 : f32
    %27 = vector.broadcast %cst_10 : f32 to vector<16x128xf32>
    %28 = arith.subf %27, %22 : vector<16x128xf32>
    %29 = arith.mulf %28, %28 : vector<16x128xf32>
    %30 = arith.mulf %16, %29 : vector<16x128xf32>
    %31 = arith.mulf %22, %22 : vector<16x128xf32>
    %32 = arith.mulf %21, %31 : vector<16x128xf32>
    %cst_11 = arith.constant 1.000000e+00 : f32
    %33 = vector.broadcast %cst_11 : f32 to vector<16x128xf32>
    %34 = arith.subf %33, %6 : vector<16x128xf32>
    %35 = arith.mulf %34, %34 : vector<16x128xf32>
    %36 = arith.mulf %35, %35 : vector<16x128xf32>
    %37 = arith.mulf %32, %36 : vector<16x128xf32>
    %c1_i32_12 = arith.constant 1 : i32
    %38 = arith.cmpi slt, %1, %c1_i32_12 : i32
    %39 = arith.extui %38 : i1 to i32
    %c0_i32_13 = arith.constant 0 : i32
    %40 = arith.cmpi ne, %39, %c0_i32_13 : i32
    scf.if %40 {
      %cst_14 = arith.constant 0.000000e+00 : f32
      %41 = vector.broadcast %cst_14 : f32 to vector<16x128xf32>
      %42 = arith.select %26, %37, %41 : vector<16x128xi1>, vector<16x128xf32>
      %43 = arith.select %24, %30, %42 : vector<16x128xi1>, vector<16x128xf32>
      %cst_15 = arith.constant 1.000000e+00 : f32
      %cst_16 = arith.constant 0.000000e+00 : f32
      %44 = vector.broadcast %cst_15 : f32 to vector<16x128xf32>
      %45 = vector.broadcast %cst_16 : f32 to vector<16x128xf32>
      %46 = arith.select %24, %44, %45 : vector<16x128xi1>, vector<16x128xf32>
      %c0_17 = arith.constant 0 : index
      %c0_18 = arith.constant 0 : index
      %c0_19 = arith.constant 0 : index
      %c0_20 = arith.constant 0 : index
      %47 = vector.load %arg4[%c0_17, %c0_18, %c0_19, %c0_20] : memref<1x2x8x128xf32, #tpu.memory_space<vmem>>, vector<1x1x8x128xf32>
      %48 = vector.shape_cast %47 : vector<1x1x8x128xf32> to vector<8x128xf32>
      %49 = vector.shape_cast %43 : vector<16x128xf32> to vector<2x8x128xf32>
      %cst_21 = arith.constant dense<0.000000e+00> : vector<8x128xf32>
      %50 = vector.multi_reduction <add>, %49, %cst_21 [0] : vector<2x8x128xf32> to vector<8x128xf32>
      %51 = arith.addf %48, %50 : vector<8x128xf32>
      %c0_22 = arith.constant 0 : index
      %c0_23 = arith.constant 0 : index
      %c0_24 = arith.constant 0 : index
      %c0_25 = arith.constant 0 : index
      %52 = vector.load %arg4[%c0_22, %c0_23, %c0_24, %c0_25] : memref<1x2x8x128xf32, #tpu.memory_space<vmem>>, vector<1x1x8x128xf32>
      %53 = vector.shape_cast %52 : vector<1x1x8x128xf32> to vector<8x128xf32>
      %54 = vector.shape_cast %51 : vector<8x128xf32> to vector<1x1x8x128xf32>
      tpu.vector_store %arg4[%c0_22, %c0_23, %c0_24, %c0_25], %54 {strides = array<i32>} : memref<1x2x8x128xf32, #tpu.memory_space<vmem>>, vector<1x1x8x128xf32>,
      %c0_26 = arith.constant 0 : index
      %c1 = arith.constant 1 : index
      %c0_27 = arith.constant 0 : index
      %c0_28 = arith.constant 0 : index
      %55 = vector.load %arg4[%c0_26, %c1, %c0_27, %c0_28] : memref<1x2x8x128xf32, #tpu.memory_space<vmem>>, vector<1x1x8x128xf32>
      %56 = vector.shape_cast %55 : vector<1x1x8x128xf32> to vector<8x128xf32>
      %57 = vector.shape_cast %46 : vector<16x128xf32> to vector<2x8x128xf32>
      %cst_29 = arith.constant dense<0.000000e+00> : vector<8x128xf32>
      %58 = vector.multi_reduction <add>, %57, %cst_29 [0] : vector<2x8x128xf32> to vector<8x128xf32>
      %59 = arith.addf %56, %58 : vector<8x128xf32>
      %c0_30 = arith.constant 0 : index
      %c1_31 = arith.constant 1 : index
      %c0_32 = arith.constant 0 : index
      %c0_33 = arith.constant 0 : index
      %60 = vector.load %arg4[%c0_30, %c1_31, %c0_32, %c0_33] : memref<1x2x8x128xf32, #tpu.memory_space<vmem>>, vector<1x1x8x128xf32>
      %61 = vector.shape_cast %60 : vector<1x1x8x128xf32> to vector<8x128xf32>
      %62 = vector.shape_cast %59 : vector<8x128xf32> to vector<1x1x8x128xf32>
      tpu.vector_store %arg4[%c0_30, %c1_31, %c0_32, %c0_33], %62 {strides = array<i32>} : memref<1x2x8x128xf32, #tpu.memory_space<vmem>>, vector<1x1x8x128xf32>,
    } else {
    }
    return
  }
  func.func @transform_0(%arg0: i32, %arg1: i32) -> (i32, i32) {
    %c1_i32 = arith.constant 1 : i32
    %0 = arith.muli %arg0, %c1_i32 : i32
    %1 = arith.addi %0, %arg1 : i32
    %c0_i32 = arith.constant 0 : i32
    %2 = arith.minsi %1, %c0_i32 : i32
    %c0_i32_0 = arith.constant 0 : i32
    %c0_i32_1 = arith.constant 0 : i32
    return %2, %c0_i32_0 : i32, i32
  }
  func.func @transform_1(%arg0: i32, %arg1: i32) -> (i32, i32) {
    %c1_i32 = arith.constant 1 : i32
    %0 = arith.muli %arg0, %c1_i32 : i32
    %1 = arith.addi %0, %arg1 : i32
    %c0_i32 = arith.constant 0 : i32
    %2 = arith.minsi %1, %c0_i32 : i32
    %c0_i32_0 = arith.constant 0 : i32
    %c0_i32_1 = arith.constant 0 : i32
    return %2, %c0_i32_0 : i32, i32
  }
  func.func @transform_2(%arg0: i32, %arg1: i32) -> (i32, i32, i32, i32) {
    %c0_i32 = arith.constant 0 : i32
    %c0_i32_0 = arith.constant 0 : i32
    %c0_i32_1 = arith.constant 0 : i32
    %c0_i32_2 = arith.constant 0 : i32
    return %arg0, %c0_i32, %c0_i32_0, %c0_i32_1 : i32, i32, i32, i32
  }
}

</mosaic_0001>

<llo_original>
// kernel: tpu_custom_call.1
$region0: #{tpu_custom_call.1}
  #allocation0 [shape = 'u32[]', space=smem, size = 0x4, offset = 0x4, fixed_abs, tag = 'smem constant byte address 0x4 - core index']
  #allocation1 [shape = 'u32[144,128]{1,0:T(1,128)}', space=vmem, size = 0x12000, scoped, tag = 'internal scratch']
  %s0 = inlined_call_operand.hbm [shape: f32[16,128], index: 0, kind: input, shape index: {}]
  %s1 = inlined_call_operand.hbm [shape: f32[16,128], index: 1, kind: input, shape index: {}]
  %s2 = inlined_call_operand.hbm [shape: f32[2,2,8,128], index: 2, kind: output, shape index: {}]
  %s3 = sld [smem:[#allocation0]]
  $region57: #{tpu_custom_call.1} parent=0
    _
  %s5 = ssub.s32 1, %s3
  %s6 = scalar_select 0, %s5, %s3
  $region1: #{tpu_custom_call.1} parent=0
    #allocation2 [shape = 'u8[16384]{0}', space=vmem, size = 0x4000, scoped, tag = 'input window, operand 0']
    #allocation3 [shape = 's32[2]{0}', space=sflag, size = 0x8, scoped, tag = 'scoped memory for tpu_custom_call.1']
    #allocation4 [shape = 's32[2]{0}', space=sflag, size = 0x8, scoped, tag = 'scoped memory for tpu_custom_call.1']
    #allocation5 [shape = 'u8[16384]{0}', space=vmem, size = 0x4000, scoped, tag = 'input window, operand 1']
    #allocation6 [shape = 's32[2]{0}', space=sflag, size = 0x8, scoped, tag = 'scoped memory for tpu_custom_call.1']
    #allocation7 [shape = 'u8[16384]{0}', space=vmem, size = 0x4000, scoped, tag = 'output window, operand 0']
    %7 = vsyncpa [#allocation3], 0
    %s8 = scalar_lea.sflag [#allocation3], 1
    %9 = vsyncpa %s8, 0
    %10 = vsyncpa [#allocation6], 0
    %s11 = scalar_lea.sflag [#allocation6], 1
    %12 = vsyncpa %s11, 0
    %13 = vsyncpa [#allocation4], 0
    %s14 = scalar_lea.sflag [#allocation4], 1
    %15 = vsyncpa %s14, 0
    loop: start=0, step=1, limit=4
    $region2: #{tpu_custom_call.1} parent=1 // loop_pre_header
      _
    $region3: #{tpu_custom_call.1} parent=1 // loop_header
      %s17 = sphi 0, %s21
      %p18 = scmp.ge.s32.totalorder %s17, 4
      %s24 = sphi 0, %s36
      %s25 = sphi 0, %s32
      %s26 = sphi 0, %s24
      %s27 = sphi 0, %s25
      %s28 = sphi 0, %s26
      %s29 = sphi 0, %s27
      %s45 = sphi 0, %s47
      %s48 = sphi 0, %s45
      %s49 = sphi 0, %s48
      %s65 = sphi 0, %s49
      %s77 = sphi 0, %s79
      %s80 = sphi 0, %s77
      %s81 = sphi 0, %s80
      %s97 = sphi 0, %s81
      %s103 = sphi 0, %s105
      %s106 = sphi 0, %s103
      %s107 = sphi 0, %s106
      %s123 = sphi 0, %s107
    $region4: #{tpu_custom_call.1} parent=1 // loop_header_branch
      %20 = sbr.rel (%p18) target = $region8
    $region5: #{tpu_custom_call.1} parent=1 // loop_body
      %s22 = ssub.s32 %s17, 1
      %s23 = ssub.s32 %s17, 2
      %s30 = sadd.s32 1, %s25
      %p31 = scmp.ge.s32.totalorder %s30, 1
      %s32 = scalar_select %p31, 0, %s30
      %s33 = sadd.s32 1, %s24
      %s34 = scalar_select %p31, %s33, %s24
      %p35 = scmp.ge.s32.totalorder %s34, 2
      %s36 = scalar_select %p35, 0, %s34
      %s37 = sadd.s32 %s24, %s25
      %p38 = scmp.lt.s32.totalorder %s37, 0
      %s39 = scalar_select %p38, %s37, 0
      %s40 = sadd.s32 %s36, %s32
      %p41 = scmp.lt.s32.totalorder %s40, 0
      %s42 = scalar_select %p41, %s40, 0
      %s43 = ssub.s32 %s39, %s42
      %p44 = scmp.eq.s32.totalorder %s43, 0
      %s46 = sadd.s32 %s45, 1
      %s47 = scalar_select %p44, %s45, %s46
      %p50 = pneg %p44
      %p51 = scmp.eq.s32.totalorder %s17, 1
      %p52 = por %p50, %p51
      %p53 = scmp.ne.s32.totalorder %s45, %s48
      %p54 = scmp.eq.s32.totalorder %s17, 0
      %p55 = por %p53, %p54
      %p56 = scmp.ne.s32.totalorder %s45, %s48
      %p57 = scmp.eq.s32.totalorder %s22, 1
      %p58 = por %p56, %p57
      %p59 = scmp.ne.s32.totalorder %s48, %s49
      %p60 = scmp.eq.s32.totalorder %s22, 0
      %p61 = por %p59, %p60
      %p62 = scmp.ne.s32.totalorder %s48, %s49
      %p63 = scmp.eq.s32.totalorder %s23, 1
      %p64 = por %p62, %p63
      %p66 = scmp.ne.s32.totalorder %s49, %s65
      %p67 = scmp.eq.s32.totalorder %s23, 0
      %p68 = por %p66, %p67
      %s69 = sadd.s32 %s24, %s25
      %p70 = scmp.lt.s32.totalorder %s69, 0
      %s71 = scalar_select %p70, %s69, 0
      %s72 = sadd.s32 %s36, %s32
      %p73 = scmp.lt.s32.totalorder %s72, 0
      %s74 = scalar_select %p73, %s72, 0
      %s75 = ssub.s32 %s71, %s74
      %p76 = scmp.eq.s32.totalorder %s75, 0
      %s78 = sadd.s32 %s77, 1
      %s79 = scalar_select %p76, %s77, %s78
      %p82 = pneg %p76
      %p83 = scmp.eq.s32.totalorder %s17, 1
      %p84 = por %p82, %p83
      %p85 = scmp.ne.s32.totalorder %s77, %s80
      %p86 = scmp.eq.s32.totalorder %s17, 0
      %p87 = por %p85, %p86
      %p88 = scmp.ne.s32.totalorder %s77, %s80
      %p89 = scmp.eq.s32.totalorder %s22, 1
      %p90 = por %p88, %p89
      %p91 = scmp.ne.s32.totalorder %s80, %s81
      %p92 = scmp.eq.s32.totalorder %s22, 0
      %p93 = por %p91, %p92
      %p94 = scmp.ne.s32.totalorder %s80, %s81
      %p95 = scmp.eq.s32.totalorder %s23, 1
      %p96 = por %p94, %p95
      %p98 = scmp.ne.s32.totalorder %s81, %s97
      %p99 = scmp.eq.s32.totalorder %s23, 0
      %p100 = por %p98, %p99
      %s101 = ssub.s32 %s24, %s36
      %p102 = scmp.eq.s32.totalorder %s101, 0
      %s104 = sadd.s32 %s103, 1
      %s105 = scalar_select %p102, %s103, %s104
      %p108 = pneg %p102
      %p109 = scmp.eq.s32.totalorder %s17, 1
      %p110 = por %p108, %p109
      %p111 = scmp.ne.s32.totalorder %s103, %s106
      %p112 = scmp.eq.s32.totalorder %s17, 0
      %p113 = por %p111, %p112
      %p114 = scmp.ne.s32.totalorder %s103, %s106
      %p115 = scmp.eq.s32.totalorder %s22, 1
      %p116 = por %p114, %p115
      %p117 = scmp.ne.s32.totalorder %s106, %s107
      %p118 = scmp.eq.s32.totalorder %s22, 0
      %p119 = por %p117, %p118
      %p120 = scmp.ne.s32.totalorder %s106, %s107
      %p121 = scmp.eq.s32.totalorder %s23, 1
      %p122 = por %p120, %p121
      %p124 = scmp.ne.s32.totalorder %s107, %s123
      %p125 = scmp.eq.s32.totalorder %s23, 0
      %p126 = por %p124, %p125
      %p127 = scmp.le.s32.totalorder 1, %s17
      %p128 = scmp.lt.s32.totalorder %s17, 3
      %p129 = pnand %p127, %p128
      %p130 = pneg %p129
      // Predicated region
      $region9: #{tpu_custom_call.1} parent=5 // pred_check
        _
      $region10: #{tpu_custom_call.1} parent=5 // pred_check_branch
        %132 = sbr.rel (%p129) target = $region12
      $region11: #{tpu_custom_call.1} parent=5 // pred_region
        %s133 = ssub.s32 %s17, 1
      $region12: #{tpu_custom_call.1} parent=5 // pred_fallthru
        _
      %p134 = scmp.lt.s32.totalorder %s17, 2
      // Predicated region
      $region13: #{tpu_custom_call.1} parent=5 // pred_check
        %p135 = pneg %p134
      $region14: #{tpu_custom_call.1} parent=5 // pred_check_branch
        %137 = sbr.rel (%p135) target = $region16
      $region15: #{tpu_custom_call.1} parent=5 // pred_region
        // Predicated region
        $region17: #{tpu_custom_call.1} parent=15 // pred_check
          %p138 = pneg %p55
        $region18: #{tpu_custom_call.1} parent=15 // pred_check_branch
          %140 = sbr.rel (%p138) target = $region20
        $region19: #{tpu_custom_call.1} parent=15 // pred_region
          %s141 = sand.u32 %s45, 1
          %s142 = scalar_lea.sflag [#allocation3], %s141
          %s143 = sand.u32 %s45, 1
          %s144 = smul.addr %s143, 16
          %s145 = scalar_lea.vmem [#allocation2], %s144
          %s146 = sadd.s32 %s24, %s25
          %p147 = scmp.lt.s32.totalorder %s146, 0
          %s148 = scalar_select %p147, %s146, 0
          %s149 = smul.u32 2, %s148
          %s151 = ssub.s32 256, 256
          %152 = vsyncadd %s142, %s151
          %s153 = smul.addr %s149, 128
          %s154 = scalar_lea.hbm %s0, %s153
          %s155 = sshll.u32 %s145, 4
          %s156 = int_to_ptr.vmem [resolvable:$true] %s155
          %161 = dma.hbm_to_vmem [thread:$0]  %s154, 256, %s156, %s142, 128, 128, 8
        $region20: #{tpu_custom_call.1} parent=15 // pred_fallthru
          _
        // Predicated region
        $region21: #{tpu_custom_call.1} parent=15 // pred_check
          %p162 = pneg %p87
        $region22: #{tpu_custom_call.1} parent=15 // pred_check_branch
          %164 = sbr.rel (%p162) target = $region24
        $region23: #{tpu_custom_call.1} parent=15 // pred_region
          %s165 = sand.u32 %s77, 1
          %s166 = scalar_lea.sflag [#allocation6], %s165
          %s167 = sand.u32 %s77, 1
          %s168 = smul.addr %s167, 16
          %s169 = scalar_lea.vmem [#allocation5], %s168
          %s170 = sadd.s32 %s24, %s25
          %p171 = scmp.lt.s32.totalorder %s170, 0
          %s172 = scalar_select %p171, %s170, 0
          %s173 = smul.u32 2, %s172
          %s175 = ssub.s32 256, 256
          %176 = vsyncadd %s166, %s175
          %s177 = smul.addr %s173, 128
          %s178 = scalar_lea.hbm %s1, %s177
          %s179 = sshll.u32 %s169, 4
          %s180 = int_to_ptr.vmem [resolvable:$true] %s179
          %185 = dma.hbm_to_vmem [thread:$0]  %s178, 256, %s180, %s166, 128, 128, 8
        $region24: #{tpu_custom_call.1} parent=15 // pred_fallthru
          _
      $region16: #{tpu_custom_call.1} parent=5 // pred_fallthru
        _
      %p186 = scmp.le.s32.totalorder 1, %s17
      %p187 = scmp.lt.s32.totalorder %s17, 3
      %p188 = pnand %p186, %p187
      %p189 = pneg %p188
      // Predicated region
      $region25: #{tpu_custom_call.1} parent=5 // pred_check
        _
      $region26: #{tpu_custom_call.1} parent=5 // pred_check_branch
        %191 = sbr.rel (%p188) target = $region28
      $region27: #{tpu_custom_call.1} parent=5 // pred_region
        %s192 = ssub.s32 %s17, 1
        %s193 = sand.u32 %s48, 1
        %s194 = scalar_lea.sflag [#allocation3], %s193
        %s195 = sand.u32 %s48, 1
        %s196 = smul.addr %s195, 16
        %s197 = scalar_lea.vmem [#allocation2], %s196
        // Predicated region
        $region29: #{tpu_custom_call.1} parent=27 // pred_check
          %p198 = pneg %p61
        $region30: #{tpu_custom_call.1} parent=27 // pred_check_branch
          %200 = sbr.rel (%p198) target = $region32
        $region31: #{tpu_custom_call.1} parent=27 // pred_region
          %201 = dma.done %s194, 256
        $region32: #{tpu_custom_call.1} parent=27 // pred_fallthru
          _
        %s202 = sand.u32 %s80, 1
        %s203 = scalar_lea.sflag [#allocation6], %s202
        %s204 = sand.u32 %s80, 1
        %s205 = smul.addr %s204, 16
        %s206 = scalar_lea.vmem [#allocation5], %s205
        // Predicated region
        $region33: #{tpu_custom_call.1} parent=27 // pred_check
          %p207 = pneg %p93
        $region34: #{tpu_custom_call.1} parent=27 // pred_check_branch
          %209 = sbr.rel (%p207) target = $region36
        $region35: #{tpu_custom_call.1} parent=27 // pred_region
          %210 = dma.done %s203, 256
        $region36: #{tpu_custom_call.1} parent=27 // pred_fallthru
          _
        %s211 = sand.u32 %s48, 1
        %s212 = scalar_lea.sflag [#allocation3], %s211
        %s213 = sand.u32 %s48, 1
        %s214 = smul.addr %s213, 16
        %s215 = scalar_lea.vmem [#allocation2], %s214
        %p216 = pneg %p61
        %p217 = pneg %p58
        %s218 = sand.u32 %s80, 1
        %s219 = scalar_lea.sflag [#allocation6], %s218
        %s220 = sand.u32 %s80, 1
        %s221 = smul.addr %s220, 16
        %s222 = scalar_lea.vmem [#allocation5], %s221
        %p223 = pneg %p93
        %p224 = pneg %p90
        %p225 = pneg %p119
        %p226 = pneg %p116
        %s227 = sand.u32 %s106, 1
        %s228 = scalar_lea.sflag [#allocation4], %s227
        %s229 = sand.u32 %s106, 1
        %s230 = smul.addr %s229, 16
        %s231 = scalar_lea.vmem [#allocation7], %s230
        %s232 = sadd.s32 %s26, %s27
        %p233 = scmp.lt.s32.totalorder %s232, 0
        %s234 = scalar_select %p233, %s232, 0
        %s235 = smul.u32 2, %s234
        %s236 = sadd.s32 %s26, %s27
        %p237 = scmp.lt.s32.totalorder %s236, 0
        %s238 = scalar_select %p237, %s236, 0
        %s239 = smul.u32 2, %s238
        %s240 = sadd.s32 %s26, %s27
        %p241 = scmp.eq.s32.totalorder %s27, 0
        // Predicated region
        $region37: #{tpu_custom_call.1} parent=27 // pred_check
          %p242 = pneg %p241
        $region38: #{tpu_custom_call.1} parent=27 // pred_check_branch
          %244 = sbr.rel (%p242) target = $region40
        $region39: #{tpu_custom_call.1} parent=27 // pred_region
          %245 = vst [vmem:[%s231] sm:$0xff] 0.0
          %246 = vst [vmem:[%s231 + $0x8] sm:$0xff] 0.0
        $region40: #{tpu_custom_call.1} parent=27 // pred_fallthru
          _
        %v247 = vld [vmem:[%s197] sm:$0xff]
        %v248 = vld [vmem:[%s197 + $0x8] sm:$0xff]
        %v249 = vld [vmem:[%s206] sm:$0xff]
        %v250 = vld [vmem:[%s206 + $0x8] sm:$0xff]
        %v251 = vand.u32 2147483647, %v247
        %v252 = vand.u32 2147483647, %v248
        %v253 = vsub.f32 0.0, %v251
        %v254 = vsub.f32 0.0, %v252
        %v255 = vmul.f32 %v253, 1.442695
        %v256 = vpow.pop %v255
        %v257 = vmul.f32 %v254, 1.442695
        %v258 = vpow.pop %v257
        %v259 = vadd.f32 %v256, 1.0
        %v260 = vadd.f32 %v258, 1.0
        %v261 = vlog2.pop %v259
        %v262 = vmul.f32 %v261, 0.6931472
        %v263 = vlog2.pop %v260
        %v264 = vmul.f32 %v263, 0.6931472
        %v265 = vmin.f32 %v247, 0.0
        %v266 = vmin.f32 %v248, 0.0
        %v267 = vsub.f32 %v265, %v262
        %v268 = vsub.f32 %v266, %v264
        %v269 = vmax.f32 %v247, 0.0
        %v270 = vmax.f32 %v248, 0.0
        %v271 = vsub.f32 0.0, %v269
        %v272 = vsub.f32 0.0, %v270
        %v273 = vsub.f32 %v271, %v262
        %v274 = vsub.f32 %v272, %v264
        %v275 = vmul.f32 %v267, 1.442695
        %v276 = vpow.pop %v275
        %v277 = vmul.f32 %v268, 1.442695
        %v278 = vpow.pop %v277
        %vm279 = vcmp.eq.f32.partialorder %v249, 1.0
        %vm280 = vcmp.eq.f32.partialorder %v250, 1.0
        %vm281 = vcmp.lt.f32.partialorder %v249, 1.0
        %vm282 = vcmp.lt.f32.partialorder %v250, 1.0
        %v283 = vsub.f32 1.0, %v276
        %v284 = vsub.f32 1.0, %v278
        %v285 = vmul.f32 %v283, %v283
        %v286 = vmul.f32 %v284, %v284
        %v287 = vmul.f32 %v267, %v285
        %v288 = vmul.f32 %v268, %v286
        %v289 = vmul.f32 %v276, %v276
        %v290 = vmul.f32 %v278, %v278
        %v291 = vmul.f32 %v273, %v289
        %v292 = vmul.f32 %v274, %v290
        %v293 = vsub.f32 1.0, %v249
        %v294 = vsub.f32 1.0, %v250
        %v295 = vmul.f32 %v293, %v293
        %v296 = vmul.f32 %v294, %v294
        %v297 = vmul.f32 %v295, %v295
        %v298 = vmul.f32 %v296, %v296
        %v299 = vmul.f32 %v291, %v297
        %v300 = vmul.f32 %v292, %v298
        %p301 = scmp.lt.s32.totalorder %s240, 1
        // Predicated region
        $region41: #{tpu_custom_call.1} parent=27 // pred_check
          %p302 = pneg %p301
        $region42: #{tpu_custom_call.1} parent=27 // pred_check_branch
          %304 = sbr.rel (%p302) target = $region44
        $region43: #{tpu_custom_call.1} parent=27 // pred_region
          %v305 = vsel %vm281, %v299, 0.0
          %v306 = vsel %vm282, %v300, 0.0
          %v307 = vsel %vm279, %v287, %v305
          %v308 = vsel %vm280, %v288, %v306
          %v309 = vsel %vm279, 1.0, 0.0
          %v310 = vsel %vm280, 1.0, 0.0
          %v311 = vld [vmem:[%s231] sm:$0xff]
          %v312 = vadd.f32 %v307, %v308
          %v313 = vadd.f32 %v311, %v312
          %314 = vst [vmem:[%s231] sm:$0xff] %v313
          %s315 = scalar_lea.vmem %s231, 8 [#allocation7]
          %v316 = vld [vmem:[%s315] sm:$0xff]
          %v317 = vadd.f32 %v309, %v310
          %v318 = vadd.f32 %v316, %v317
          %319 = vst [vmem:[%s315] sm:$0xff] %v318
        $region44: #{tpu_custom_call.1} parent=27 // pred_fallthru
          _
        %s320 = sand.u32 %s106, 1
        %s321 = scalar_lea.sflag [#allocation4], %s320
        %s322 = sand.u32 %s106, 1
        %s323 = smul.addr %s322, 16
        %s324 = scalar_lea.vmem [#allocation7], %s323
        // Predicated region
        $region45: #{tpu_custom_call.1} parent=27 // pred_check
          %p325 = pneg %p116
        $region46: #{tpu_custom_call.1} parent=27 // pred_check_branch
          %327 = sbr.rel (%p325) target = $region48
        $region47: #{tpu_custom_call.1} parent=27 // pred_region
          %s329 = ssub.s32 256, 256
          %330 = vsyncadd %s321, %s329
          %s331 = smul.addr %s26, 2
          %s332 = smul.addr %s331, 128
          %s333 = scalar_lea.hbm %s2, %s332
          %s334 = sshll.u32 %s324, 4
          %s335 = int_to_ptr.vmem [resolvable:$true] %s334
          %340 = dma.vmem_to_hbm [thread:$0]  %s335, 256, %s333, %s321, 128, 128, 8
        $region48: #{tpu_custom_call.1} parent=27 // pred_fallthru
          _
      $region28: #{tpu_custom_call.1} parent=5 // pred_fallthru
        _
      %p341 = scmp.le.s32.totalorder 2, %s17
      // Predicated region
      $region49: #{tpu_custom_call.1} parent=5 // pred_check
        %p342 = pneg %p341
      $region50: #{tpu_custom_call.1} parent=5 // pred_check_branch
        %344 = sbr.rel (%p342) target = $region52
      $region51: #{tpu_custom_call.1} parent=5 // pred_region
        %s345 = ssub.s32 %s17, 2
        // Predicated region
        $region53: #{tpu_custom_call.1} parent=51 // pred_check
          %p346 = pneg %p122
        $region54: #{tpu_custom_call.1} parent=51 // pred_check_branch
          %348 = sbr.rel (%p346) target = $region56
        $region55: #{tpu_custom_call.1} parent=51 // pred_region
          %s349 = sand.u32 %s107, 1
          %s350 = scalar_lea.sflag [#allocation4], %s349
          %s351 = sand.u32 %s107, 1
          %s352 = smul.addr %s351, 16
          %s353 = scalar_lea.vmem [#allocation7], %s352
          %354 = dma.done %s350, 256
        $region56: #{tpu_custom_call.1} parent=51 // pred_fallthru
          _
      $region52: #{tpu_custom_call.1} parent=5 // pred_fallthru
        _
    $region6: #{tpu_custom_call.1} parent=1 // loop_footer
      %s21 = sadd.s32 1, %s17
    $region7: #{tpu_custom_call.1} parent=1 // loop_footer_branch
      %16 = sbr.rel target = $region3
    $region8: #{tpu_custom_call.1} parent=1 // loop_exit
      _
    %355 = vsyncpa [#allocation3], 1
    %s356 = scalar_lea.sflag [#allocation3], 1
    %357 = vsyncpa %s356, 1
    %358 = vsyncpa [#allocation6], 1
    %s359 = scalar_lea.sflag [#allocation6], 1
    %360 = vsyncpa %s359, 1
    %361 = vsyncpa [#allocation4], 1
    %s362 = scalar_lea.sflag [#allocation4], 1
    %363 = vsyncpa %s362, 1

</llo_original>
